<compile_context>
chip_gen: v7x
topology: tpu7x:2x2x1
jax: 0.10.0
libtpu: 0.0.40
codegen_flags: <defaults>
</compile_context>

<pallas_src>
import jax
import jax.numpy as jnp
from jax.experimental import pallas as pl
from jax.experimental.pallas import tpu as pltpu

NEURONS = 64   # matches `neurons = 64` at module scope in the reference script
IN_DIM = 3
OUT_DIM = 1


def mlp_kernel(xt_ref, w1t_ref, b1_ref, w2t_ref, b2_ref, w3_ref, b3_ref, ot_ref):
    """Fused 3-layer MLP, batch on the lane axis.

    xt_ref : (IN_DIM, BT)       input tile, batch on lanes
    w1t_ref: (NEURONS, IN_DIM)  W1^T
    b1_ref : (NEURONS, 1)
    w2t_ref: (NEURONS, NEURONS) W2^T
    b2_ref : (NEURONS, 1)
    w3_ref : (NEURONS, 1)       w3 column
    b3_ref : (1, 1)
    ot_ref : (1, BT)            lane-dense output tile
    """
    xt = xt_ref[...]                                   # (3, BT) f32

    # Layer 1: Linear(3 -> 64) as 3 VPU broadcast-FMAs (K=3 is a degenerate MXU shape).
    y1t = (w1t_ref[:, 0:1] * xt[0:1, :]
           + w1t_ref[:, 1:2] * xt[1:2, :]
           + w1t_ref[:, 2:3] * xt[2:3, :]
           + b1_ref[...])                              # (64, BT)
    y1t = jnp.maximum(y1t, 0.0)

    # Layer 2: Linear(64 -> 64) — the one MXU-worthy matmul: (64,64) @ (64,BT), f32 acc.
    y2t = jnp.dot(w2t_ref[...], y1t,
                  preferred_element_type=jnp.float32) + b2_ref[...]
    y2t = jnp.maximum(y2t, 0.0)                        # (64, BT)

    # Layer 3: Linear(64 -> 1) as VPU multiply + sublane reduction (N=1 would waste the MXU).
    out_t = jnp.sum(w3_ref[...] * y2t, axis=0, keepdims=True) + b3_ref[...]  # (1, BT)

    ot_ref[...] = out_t.astype(ot_ref.dtype)


def _round_up(n, m):
    return ((n + m - 1) // m) * m


def neural_net_forward(x, params, block_rows=4096):
    """x: (B, IN_DIM) f32. params: dict of w1,b1,w2,b2,w3,b3 (PyTorch-style x @ W + b layout)."""
    B = x.shape[0]

    # Tile-size selection:
    #  * lane-aligned (multiple of 128),
    #  * no bigger than the (128-rounded) batch (avoid padding tiny batches to block_rows),
    #  * for large batches keep num_tiles >= 2 so v7x megacore gets both TCs busy.
    bt = max(128, (block_rows // 128) * 128)
    bt = min(bt, _round_up(B, 128))
    if B > 128 and pl.cdiv(B, bt) < 2:
        bt = max(128, _round_up(pl.cdiv(B, 2), 128))
    num_tiles = pl.cdiv(B, bt)
    B_pad = num_tiles * bt

    # Wrapper-side layout plumbing: pad batch to a tile multiple, batch onto the lane axis.
    # Single pad + transpose (XLA fuses this into one relayout pass).
    xt = jnp.pad(x, ((0, B_pad - B), (0, 0))).T        # (IN_DIM, B_pad)
    w1t = params["w1"].T                               # (64, 3)
    b1c = params["b1"].reshape(NEURONS, 1)             # (64, 1)
    w2t = params["w2"].T                               # (64, 64)
    b2c = params["b2"].reshape(NEURONS, 1)             # (64, 1)
    w3c = params["w3"].reshape(NEURONS, OUT_DIM)       # (64, 1)
    b3 = params["b3"].reshape(1, 1)                    # (1, 1)

    # Weights: full-extent blocks, constant index_map -> resident in VMEM across grid steps.
    full = lambda a: pl.BlockSpec(a.shape, lambda i: (0,) * a.ndim)

    out_t = pl.pallas_call(
        mlp_kernel,
        out_shape=jax.ShapeDtypeStruct((1, B_pad), jnp.float32),
        grid=(num_tiles,),
        in_specs=[
            pl.BlockSpec((IN_DIM, bt), lambda i: (0, i)),   # x tile: pipelined over batch
            full(w1t), full(b1c), full(w2t), full(b2c), full(w3c), full(b3),
        ],
        out_specs=pl.BlockSpec((1, bt), lambda i: (0, i)),  # lane-dense output tile
        compiler_params=pltpu.CompilerParams(
            dimension_semantics=("parallel",),              # v7x: shard batch over 2 TCs
        ),
    )(xt, w1t, b1c, w2t, b2c, w3c, b3)

    # Back to (B, 1), dropping the batch padding.
    return out_t[0, :B].reshape(B, OUT_DIM)


def init_params(key, in_dim=IN_DIM, neurons=NEURONS, out_dim=OUT_DIM):
    """Deterministic init mimicking nn.Linear's default U(-1/sqrt(fan_in), 1/sqrt(fan_in)).
    Weights are stored (in_features, out_features) so the math is x @ W + b."""
    keys = jax.random.split(key, 6)

    def lin(kw, kb, fan_in, fan_out):
        bound = 1.0 / jnp.sqrt(jnp.float32(fan_in))
        w = jax.random.uniform(kw, (fan_in, fan_out), jnp.float32, -bound, bound)
        b = jax.random.uniform(kb, (1, fan_out), jnp.float32, -bound, bound)
        return w, b

    w1, b1 = lin(keys[0], keys[1], in_dim, neurons)
    w2, b2 = lin(keys[2], keys[3], neurons, neurons)
    w3, b3 = lin(keys[4], keys[5], neurons, out_dim)
    return {"w1": w1, "b1": b1, "w2": w2, "b2": b2, "w3": w3, "b3": b3}


def reference_forward(x, p):
    y1 = jnp.maximum(x @ p["w1"] + p["b1"], 0.0)
    y2 = jnp.maximum(y1 @ p["w2"] + p["b2"], 0.0)
    return y2 @ p["w3"] + p["b3"]


if __name__ == "__main__":
    key = jax.random.PRNGKey(0)
    k_param, k_x = jax.random.split(key)

    params = init_params(k_param)

    # Small deterministic input consistent with the module (batch=8, features=3).
    batch = 8
    x = jax.random.normal(k_x, (batch, IN_DIM), jnp.float32)

    out = neural_net_forward(x, params)
    out = jax.block_until_ready(out)

    ref = reference_forward(x, params)
    assert out.shape == (batch, OUT_DIM)
    assert jnp.allclose(out, ref, atol=1e-5, rtol=1e-5), "mismatch vs JAX reference"

    # Also exercise a multi-tile batch (crosses a grid boundary, non-multiple of tile,
    # and takes the >=2-tiles megacore path).
    big_B = 1200
    xb = jax.random.normal(jax.random.PRNGKey(1), (big_B, IN_DIM), jnp.float32)
    out_b = jax.block_until_ready(neural_net_forward(xb, params))
    ref_b = reference_forward(xb, params)
    assert out_b.shape == (big_B, OUT_DIM)
    assert jnp.allclose(out_b, ref_b, atol=1e-5, rtol=1e-5), "mismatch vs JAX reference (big batch)"

    print("KERNEL_OK")
</pallas_src>

<mosaic_0001>
module attributes {stable_mosaic.version = 11 : i64} {
  func.func @mlp_kernel(%arg0: i32, %arg1: memref<3x128xf32, #tpu.memory_space<vmem>>, %arg2: memref<64x3xf32, #tpu.memory_space<vmem>>, %arg3: memref<64x1xf32, #tpu.memory_space<vmem>>, %arg4: memref<64x64xf32, #tpu.memory_space<vmem>>, %arg5: memref<64x1xf32, #tpu.memory_space<vmem>>, %arg6: memref<64x1xf32, #tpu.memory_space<vmem>>, %arg7: memref<1x1xf32, #tpu.memory_space<vmem>>, %arg8: memref<1x128xf32, #tpu.memory_space<vmem>>) attributes {dimension_semantics = [#tpu.dimension_semantics<parallel>], iteration_bounds = array<i64: 1>, scalar_prefetch = 0 : i64, scratch_operands = 0 : i64, tpu.core_type = #tpu.core_type<tc>, window_params = [{transform_indices = @transform_0, window_bounds = array<i64: 3, 128>}, {pipeline_mode = #tpu.pipeline_mode<synchronous>, transform_indices = @transform_1, window_bounds = array<i64: 64, 3>}, {pipeline_mode = #tpu.pipeline_mode<synchronous>, transform_indices = @transform_2, window_bounds = array<i64: 64, 1>}, {pipeline_mode = #tpu.pipeline_mode<synchronous>, transform_indices = @transform_3, window_bounds = array<i64: 64, 64>}, {pipeline_mode = #tpu.pipeline_mode<synchronous>, transform_indices = @transform_4, window_bounds = array<i64: 64, 1>}, {pipeline_mode = #tpu.pipeline_mode<synchronous>, transform_indices = @transform_5, window_bounds = array<i64: 64, 1>}, {pipeline_mode = #tpu.pipeline_mode<synchronous>, transform_indices = @transform_6, window_bounds = array<i64: 1, 1>}, {transform_indices = @transform_7, window_bounds = array<i64: 1, 128>}]} {
    %c0 = arith.constant 0 : index
    %c0_0 = arith.constant 0 : index
    %0 = vector.load %arg1[%c0, %c0_0] : memref<3x128xf32, #tpu.memory_space<vmem>>, vector<3x128xf32>
    %c0_1 = arith.constant 0 : index
    %c0_2 = arith.constant 0 : index
    %1 = vector.load %arg2[%c0_1, %c0_2] : memref<64x3xf32, #tpu.memory_space<vmem>>, vector<64x1xf32>
    %2 = vector.extract_strided_slice %0 {offsets = [0, 0], sizes = [1, 128], strides = [1, 1]} : vector<3x128xf32> to vector<1x128xf32>
    %3 = vector.broadcast %1 : vector<64x1xf32> to vector<64x128xf32>
    %4 = vector.broadcast %2 : vector<1x128xf32> to vector<64x128xf32>
    %5 = arith.mulf %3, %4 : vector<64x128xf32>
    %c0_3 = arith.constant 0 : index
    %c1 = arith.constant 1 : index
    %6 = vector.load %arg2[%c0_3, %c1] : memref<64x3xf32, #tpu.memory_space<vmem>>, vector<64x1xf32>
    %7 = vector.extract_strided_slice %0 {offsets = [1, 0], sizes = [1, 128], strides = [1, 1]} : vector<3x128xf32> to vector<1x128xf32>
    %8 = vector.broadcast %6 : vector<64x1xf32> to vector<64x128xf32>
    %9 = vector.broadcast %7 : vector<1x128xf32> to vector<64x128xf32>
    %10 = arith.mulf %8, %9 : vector<64x128xf32>
    %11 = arith.addf %5, %10 : vector<64x128xf32>
    %c0_4 = arith.constant 0 : index
    %c2 = arith.constant 2 : index
    %12 = vector.load %arg2[%c0_4, %c2] : memref<64x3xf32, #tpu.memory_space<vmem>>, vector<64x1xf32>
    %13 = vector.extract_strided_slice %0 {offsets = [2, 0], sizes = [1, 128], strides = [1, 1]} : vector<3x128xf32> to vector<1x128xf32>
    %14 = vector.broadcast %12 : vector<64x1xf32> to vector<64x128xf32>
    %15 = vector.broadcast %13 : vector<1x128xf32> to vector<64x128xf32>
    %16 = arith.mulf %14, %15 : vector<64x128xf32>
    %17 = arith.addf %11, %16 : vector<64x128xf32>
    %c0_5 = arith.constant 0 : index
    %c0_6 = arith.constant 0 : index
    %18 = vector.load %arg3[%c0_5, %c0_6] : memref<64x1xf32, #tpu.memory_space<vmem>>, vector<64x1xf32>
    %19 = vector.broadcast %18 : vector<64x1xf32> to vector<64x128xf32>
    %20 = arith.addf %17, %19 : vector<64x128xf32>
    %cst = arith.constant 0.000000e+00 : f32
    %21 = vector.broadcast %cst : f32 to vector<64x128xf32>
    %22 = arith.maximumf %20, %21 : vector<64x128xf32>
    %c0_7 = arith.constant 0 : index
    %c0_8 = arith.constant 0 : index
    %23 = vector.load %arg4[%c0_7, %c0_8] : memref<64x64xf32, #tpu.memory_space<vmem>>, vector<64x64xf32>
    %cst_9 = arith.constant dense<0.000000e+00> : vector<64x128xf32>
    %24 = tpu.matmul %23, %22, %cst_9 {dimension_numbers = #tpu.dot_dimension_numbers<[1], [0], [0], [1], [0, 0, 1, 1], [], []>} : vector<64x64xf32>, vector<64x128xf32>, vector<64x128xf32> -> vector<64x128xf32>
    %c0_10 = arith.constant 0 : index
    %c0_11 = arith.constant 0 : index
    %25 = vector.load %arg5[%c0_10, %c0_11] : memref<64x1xf32, #tpu.memory_space<vmem>>, vector<64x1xf32>
    %26 = vector.broadcast %25 : vector<64x1xf32> to vector<64x128xf32>
    %27 = arith.addf %24, %26 : vector<64x128xf32>
    %cst_12 = arith.constant 0.000000e+00 : f32
    %28 = vector.broadcast %cst_12 : f32 to vector<64x128xf32>
    %29 = arith.maximumf %27, %28 : vector<64x128xf32>
    %c0_13 = arith.constant 0 : index
    %c0_14 = arith.constant 0 : index
    %30 = vector.load %arg6[%c0_13, %c0_14] : memref<64x1xf32, #tpu.memory_space<vmem>>, vector<64x1xf32>
    %31 = vector.broadcast %30 : vector<64x1xf32> to vector<64x128xf32>
    %32 = arith.mulf %31, %29 : vector<64x128xf32>
    %cst_15 = arith.constant dense<0.000000e+00> : vector<128xf32>
    %33 = vector.multi_reduction <add>, %32, %cst_15 [0] : vector<64x128xf32> to vector<128xf32>
    %34 = vector.shape_cast %33 : vector<128xf32> to vector<1x128xf32>
    %c0_16 = arith.constant 0 : index
    %c0_17 = arith.constant 0 : index
    %35 = vector.load %arg7[%c0_16, %c0_17] : memref<1x1xf32, #tpu.memory_space<vmem>>, vector<1x1xf32>
    %36 = vector.broadcast %35 : vector<1x1xf32> to vector<1x128xf32>
    %37 = arith.addf %34, %36 : vector<1x128xf32>
    %c0_18 = arith.constant 0 : index
    %c0_19 = arith.constant 0 : index
    %38 = vector.load %arg8[%c0_18, %c0_19] : memref<1x128xf32, #tpu.memory_space<vmem>>, vector<1x128xf32>
    tpu.vector_store %arg8[%c0_18, %c0_19], %37 {strides = array<i32>} : memref<1x128xf32, #tpu.memory_space<vmem>>, vector<1x128xf32>,
    return
  }
  func.func @transform_0(%arg0: i32) -> (i32, i32) {
    %c0_i32 = arith.constant 0 : i32
    %c0_i32_0 = arith.constant 0 : i32
    return %c0_i32, %arg0 : i32, i32
  }
  func.func @transform_1(%arg0: i32) -> (i32, i32) {
    %c0_i32 = arith.constant 0 : i32
    %c0_i32_0 = arith.constant 0 : i32
    %c0_i32_1 = arith.constant 0 : i32
    return %c0_i32, %c0_i32_0 : i32, i32
  }
  func.func @transform_2(%arg0: i32) -> (i32, i32) {
    %c0_i32 = arith.constant 0 : i32
    %c0_i32_0 = arith.constant 0 : i32
    %c0_i32_1 = arith.constant 0 : i32
    return %c0_i32, %c0_i32_0 : i32, i32
  }
  func.func @transform_3(%arg0: i32) -> (i32, i32) {
    %c0_i32 = arith.constant 0 : i32
    %c0_i32_0 = arith.constant 0 : i32
    %c0_i32_1 = arith.constant 0 : i32
    return %c0_i32, %c0_i32_0 : i32, i32
  }
  func.func @transform_4(%arg0: i32) -> (i32, i32) {
    %c0_i32 = arith.constant 0 : i32
    %c0_i32_0 = arith.constant 0 : i32
    %c0_i32_1 = arith.constant 0 : i32
    return %c0_i32, %c0_i32_0 : i32, i32
  }
  func.func @transform_5(%arg0: i32) -> (i32, i32) {
    %c0_i32 = arith.constant 0 : i32
    %c0_i32_0 = arith.constant 0 : i32
    %c0_i32_1 = arith.constant 0 : i32
    return %c0_i32, %c0_i32_0 : i32, i32
  }
  func.func @transform_6(%arg0: i32) -> (i32, i32) {
    %c0_i32 = arith.constant 0 : i32
    %c0_i32_0 = arith.constant 0 : i32
    %c0_i32_1 = arith.constant 0 : i32
    return %c0_i32, %c0_i32_0 : i32, i32
  }
  func.func @transform_7(%arg0: i32) -> (i32, i32) {
    %c0_i32 = arith.constant 0 : i32
    %c0_i32_0 = arith.constant 0 : i32
    return %c0_i32, %arg0 : i32, i32
  }
}

</mosaic_0001>

<llo_original>
// kernel: tpu_custom_call.1
$region0: #{tpu_custom_call.1}
  #allocation0 [shape = 'u32[]', space=smem, size = 0x4, offset = 0x4, fixed_abs, tag = 'smem constant byte address 0x4 - core index']
  #allocation1 [shape = 'u32[144,128]{1,0:T(1,128)}', space=vmem, size = 0x12000, scoped, tag = 'internal scratch']
  #allocation2 [shape = 'f32[1,1]{1,0:T(1,128)S(1)}', space=vmem, size = 0x200, scoped, tag = 'scoped memory for tpu_custom_call.1']
  %s0 = inlined_call_operand.vmem [shape: f32[3,128], index: 0, kind: input, shape index: {}]
  %s1 = inlined_call_operand.vmem [shape: f32[64,3], index: 1, kind: input, shape index: {}]
  %s2 = inlined_call_operand.vmem [shape: f32[64,1], index: 2, kind: input, shape index: {}]
  %s3 = inlined_call_operand.vmem [shape: f32[64,64], index: 3, kind: input, shape index: {}]
  %s4 = inlined_call_operand.vmem [shape: f32[64,1], index: 4, kind: input, shape index: {}]
  %s5 = inlined_call_operand.vmem [shape: f32[64,1], index: 5, kind: input, shape index: {}]
  %s6 = inlined_call_operand.<no memory space> [shape: f32[1,1], index: 6, kind: input, shape index: {}]
  %s7 = inlined_call_operand.hbm [shape: f32[1,128], index: 7, kind: output, shape index: {}]
  %s8 = sld [smem:[#allocation0]]
  $region38: #{tpu_custom_call.1} parent=0
    _
  %s10 = ssub.s32 1, %s8
  %s11 = scalar_select 0, %s10, %s8
  %v12 = vstv %s6
  %13 = vst [vmem:[#allocation2] sm:$0x1] %v12
  $region1: #{tpu_custom_call.1} parent=0
    #allocation3 [shape = 'u8[512]{0}', space=vmem, size = 0x400, scoped, tag = 'output window, operand 0, single buffered']
    #allocation4 [shape = 's32[1]{0}', space=sflag, size = 0x4, scoped, tag = 'scoped memory for tpu_custom_call.1']
    %14 = vsyncpa [#allocation4], 0
    // Predicated region
    $region2: #{tpu_custom_call.1} parent=1 // pred_check
      _
    $region3: #{tpu_custom_call.1} parent=1 // pred_check_branch
      %16 = sbr.rel (0) target = $region5
    $region4: #{tpu_custom_call.1} parent=1 // pred_region
      _
    $region5: #{tpu_custom_call.1} parent=1 // pred_fallthru
      _
    // Predicated region
    $region6: #{tpu_custom_call.1} parent=1 // pred_check
      _
    $region7: #{tpu_custom_call.1} parent=1 // pred_check_branch
      %18 = sbr.rel (0) target = $region9
    $region8: #{tpu_custom_call.1} parent=1 // pred_region
      _
    $region9: #{tpu_custom_call.1} parent=1 // pred_fallthru
      _
    // Predicated region
    $region10: #{tpu_custom_call.1} parent=1 // pred_check
      _
    $region11: #{tpu_custom_call.1} parent=1 // pred_check_branch
      %20 = sbr.rel (0) target = $region13
    $region12: #{tpu_custom_call.1} parent=1 // pred_region
      _
    $region13: #{tpu_custom_call.1} parent=1 // pred_fallthru
      _
    // Predicated region
    $region14: #{tpu_custom_call.1} parent=1 // pred_check
      _
    $region15: #{tpu_custom_call.1} parent=1 // pred_check_branch
      %22 = sbr.rel (0) target = $region17
    $region16: #{tpu_custom_call.1} parent=1 // pred_region
      _
    $region17: #{tpu_custom_call.1} parent=1 // pred_fallthru
      _
    // Predicated region
    $region18: #{tpu_custom_call.1} parent=1 // pred_check
      _
    $region19: #{tpu_custom_call.1} parent=1 // pred_check_branch
      %24 = sbr.rel (0) target = $region21
    $region20: #{tpu_custom_call.1} parent=1 // pred_region
      _
    $region21: #{tpu_custom_call.1} parent=1 // pred_fallthru
      _
    // Predicated region
    $region22: #{tpu_custom_call.1} parent=1 // pred_check
      _
    $region23: #{tpu_custom_call.1} parent=1 // pred_check_branch
      %26 = sbr.rel (0) target = $region25
    $region24: #{tpu_custom_call.1} parent=1 // pred_region
      _
    $region25: #{tpu_custom_call.1} parent=1 // pred_fallthru
      _
    // Predicated region
    $region26: #{tpu_custom_call.1} parent=1 // pred_check
      _
    $region27: #{tpu_custom_call.1} parent=1 // pred_check_branch
      %28 = sbr.rel (0) target = $region29
    $region28: #{tpu_custom_call.1} parent=1 // pred_region
      _
    $region29: #{tpu_custom_call.1} parent=1 // pred_fallthru
      _
    %v29 = vld [vmem:[%s0] sm:$0x7]
    %v30 = vld [vmem:[%s1] sm:$0xff]
    %v31 = vld [vmem:[%s1 + $0x8] sm:$0xff]
    %v32 = vld [vmem:[%s1 + $0x10] sm:$0xff]
    %v33 = vld [vmem:[%s1 + $0x18] sm:$0xff]
    %v34 = vld [vmem:[%s1 + $0x20] sm:$0xff]
    %v35 = vld [vmem:[%s1 + $0x28] sm:$0xff]
    %v36 = vld [vmem:[%s1 + $0x30] sm:$0xff]
    %v37 = vld [vmem:[%s1 + $0x38] sm:$0xff]
    %39 = vset.pattern.permute.xlu0 0
    %40 = vperm.xlu0 %39, %v30
    %v41 = vpop.permute.xlu0 %40
    %44 = vset.pattern.permute.xlu0 0
    %45 = vperm.xlu0 %44, %v31
    %v46 = vpop.permute.xlu0 %45
    %49 = vset.pattern.permute.xlu0 0
    %50 = vperm.xlu0 %49, %v32
    %v51 = vpop.permute.xlu0 %50
    %54 = vset.pattern.permute.xlu0 0
    %55 = vperm.xlu0 %54, %v33
    %v56 = vpop.permute.xlu0 %55
    %59 = vset.pattern.permute.xlu0 0
    %60 = vperm.xlu0 %59, %v34
    %v61 = vpop.permute.xlu0 %60
    %64 = vset.pattern.permute.xlu0 0
    %65 = vperm.xlu0 %64, %v35
    %v66 = vpop.permute.xlu0 %65
    %69 = vset.pattern.permute.xlu0 0
    %70 = vperm.xlu0 %69, %v36
    %v71 = vpop.permute.xlu0 %70
    %74 = vset.pattern.permute.xlu0 0
    %75 = vperm.xlu0 %74, %v37
    %v76 = vpop.permute.xlu0 %75
    %v78 = vlaneseq
    %v79 = vshrl.u32 %v78, 7
    %v80 = vsub.s32 0, %v79
    %v81 = vrot.slane %v29, %v80
    %v82 = vmul.f32 %v41, %v81
    %v83 = vmul.f32 %v46, %v81
    %v84 = vmul.f32 %v51, %v81
    %v85 = vmul.f32 %v56, %v81
    %v86 = vmul.f32 %v61, %v81
    %v87 = vmul.f32 %v66, %v81
    %v88 = vmul.f32 %v71, %v81
    %v89 = vmul.f32 %v76, %v81
    %90 = vset.pattern.permute.xlu0 1
    %91 = vperm.xlu0 %90, %v30
    %v92 = vpop.permute.xlu0 %91
    %94 = vset.pattern.permute.xlu0 1
    %95 = vperm.xlu0 %94, %v31
    %v96 = vpop.permute.xlu0 %95
    %98 = vset.pattern.permute.xlu0 1
    %99 = vperm.xlu0 %98, %v32
    %v100 = vpop.permute.xlu0 %99
    %102 = vset.pattern.permute.xlu0 1
    %103 = vperm.xlu0 %102, %v33
    %v104 = vpop.permute.xlu0 %103
    %106 = vset.pattern.permute.xlu0 1
    %107 = vperm.xlu0 %106, %v34
    %v108 = vpop.permute.xlu0 %107
    %110 = vset.pattern.permute.xlu0 1
    %111 = vperm.xlu0 %110, %v35
    %v112 = vpop.permute.xlu0 %111
    %114 = vset.pattern.permute.xlu0 1
    %115 = vperm.xlu0 %114, %v36
    %v116 = vpop.permute.xlu0 %115
    %118 = vset.pattern.permute.xlu0 1
    %119 = vperm.xlu0 %118, %v37
    %v120 = vpop.permute.xlu0 %119
    %v122 = vlaneseq
    %v123 = vshrl.u32 %v122, 7
    %v124 = vsub.s32 1, %v123
    %v125 = vrot.slane %v29, %v124
    %v126 = vmul.f32 %v92, %v125
    %v127 = vmul.f32 %v96, %v125
    %v128 = vmul.f32 %v100, %v125
    %v129 = vmul.f32 %v104, %v125
    %v130 = vmul.f32 %v108, %v125
    %v131 = vmul.f32 %v112, %v125
    %v132 = vmul.f32 %v116, %v125
    %v133 = vmul.f32 %v120, %v125
    %v134 = vadd.f32 %v82, %v126
    %v135 = vadd.f32 %v83, %v127
    %v136 = vadd.f32 %v84, %v128
    %v137 = vadd.f32 %v85, %v129
    %v138 = vadd.f32 %v86, %v130
    %v139 = vadd.f32 %v87, %v131
    %v140 = vadd.f32 %v88, %v132
    %v141 = vadd.f32 %v89, %v133
    %142 = vset.pattern.permute.xlu0 2
    %143 = vperm.xlu0 %142, %v30
    %v144 = vpop.permute.xlu0 %143
    %146 = vset.pattern.permute.xlu0 2
    %147 = vperm.xlu0 %146, %v31
    %v148 = vpop.permute.xlu0 %147
    %150 = vset.pattern.permute.xlu0 2
    %151 = vperm.xlu0 %150, %v32
    %v152 = vpop.permute.xlu0 %151
    %154 = vset.pattern.permute.xlu0 2
    %155 = vperm.xlu0 %154, %v33
    %v156 = vpop.permute.xlu0 %155
    %158 = vset.pattern.permute.xlu0 2
    %159 = vperm.xlu0 %158, %v34
    %v160 = vpop.permute.xlu0 %159
    %162 = vset.pattern.permute.xlu0 2
    %163 = vperm.xlu0 %162, %v35
    %v164 = vpop.permute.xlu0 %163
    %166 = vset.pattern.permute.xlu0 2
    %167 = vperm.xlu0 %166, %v36
    %v168 = vpop.permute.xlu0 %167
    %170 = vset.pattern.permute.xlu0 2
    %171 = vperm.xlu0 %170, %v37
    %v172 = vpop.permute.xlu0 %171
    %v174 = vlaneseq
    %v175 = vshrl.u32 %v174, 7
    %v176 = vsub.s32 2, %v175
    %v177 = vrot.slane %v29, %v176
    %v178 = vmul.f32 %v144, %v177
    %v179 = vmul.f32 %v148, %v177
    %v180 = vmul.f32 %v152, %v177
    %v181 = vmul.f32 %v156, %v177
    %v182 = vmul.f32 %v160, %v177
    %v183 = vmul.f32 %v164, %v177
    %v184 = vmul.f32 %v168, %v177
    %v185 = vmul.f32 %v172, %v177
    %v186 = vadd.f32 %v134, %v178
    %v187 = vadd.f32 %v135, %v179
    %v188 = vadd.f32 %v136, %v180
    %v189 = vadd.f32 %v137, %v181
    %v190 = vadd.f32 %v138, %v182
    %v191 = vadd.f32 %v139, %v183
    %v192 = vadd.f32 %v140, %v184
    %v193 = vadd.f32 %v141, %v185
    %v194 = vld [vmem:[%s2] sm:$0xff]
    %v195 = vld [vmem:[%s2 + $0x8] sm:$0xff]
    %v196 = vld [vmem:[%s2 + $0x10] sm:$0xff]
    %v197 = vld [vmem:[%s2 + $0x18] sm:$0xff]
    %v198 = vld [vmem:[%s2 + $0x20] sm:$0xff]
    %v199 = vld [vmem:[%s2 + $0x28] sm:$0xff]
    %v200 = vld [vmem:[%s2 + $0x30] sm:$0xff]
    %v201 = vld [vmem:[%s2 + $0x38] sm:$0xff]
    %203 = vset.pattern.permute.xlu0 0
    %204 = vperm.xlu0 %203, %v194
    %v205 = vpop.permute.xlu0 %204
    %208 = vset.pattern.permute.xlu0 0
    %209 = vperm.xlu0 %208, %v195
    %v210 = vpop.permute.xlu0 %209
    %213 = vset.pattern.permute.xlu0 0
    %214 = vperm.xlu0 %213, %v196
    %v215 = vpop.permute.xlu0 %214
    %218 = vset.pattern.permute.xlu0 0
    %219 = vperm.xlu0 %218, %v197
    %v220 = vpop.permute.xlu0 %219
    %223 = vset.pattern.permute.xlu0 0
    %224 = vperm.xlu0 %223, %v198
    %v225 = vpop.permute.xlu0 %224
    %228 = vset.pattern.permute.xlu0 0
    %229 = vperm.xlu0 %228, %v199
    %v230 = vpop.permute.xlu0 %229
    %233 = vset.pattern.permute.xlu0 0
    %234 = vperm.xlu0 %233, %v200
    %v235 = vpop.permute.xlu0 %234
    %238 = vset.pattern.permute.xlu0 0
    %239 = vperm.xlu0 %238, %v201
    %v240 = vpop.permute.xlu0 %239
    %v242 = vadd.f32 %v186, %v205
    %v243 = vadd.f32 %v187, %v210
    %v244 = vadd.f32 %v188, %v215
    %v245 = vadd.f32 %v189, %v220
    %v246 = vadd.f32 %v190, %v225
    %v247 = vadd.f32 %v191, %v230
    %v248 = vadd.f32 %v192, %v235
    %v249 = vadd.f32 %v193, %v240
    %v250 = vmax.f32 %v242, 0.0
    %v251 = vmax.f32 %v243, 0.0
    %v252 = vmax.f32 %v244, 0.0
    %v253 = vmax.f32 %v245, 0.0
    %v254 = vmax.f32 %v246, 0.0
    %v255 = vmax.f32 %v247, 0.0
    %v256 = vmax.f32 %v248, 0.0
    %v257 = vmax.f32 %v249, 0.0
    %v258 = vld [vmem:[%s3] sm:$0xff]
    %v259 = vld [vmem:[%s3 + $0x8] sm:$0xff]
    %v260 = vld [vmem:[%s3 + $0x10] sm:$0xff]
    %v261 = vld [vmem:[%s3 + $0x18] sm:$0xff]
    %v262 = vld [vmem:[%s3 + $0x20] sm:$0xff]
    %v263 = vld [vmem:[%s3 + $0x28] sm:$0xff]
    %v264 = vld [vmem:[%s3 + $0x30] sm:$0xff]
    %v265 = vld [vmem:[%s3 + $0x38] sm:$0xff]
    %v266 = vld [vmem:[%s4] sm:$0xff]
    %v267 = vld [vmem:[%s4 + $0x8] sm:$0xff]
    %v268 = vld [vmem:[%s4 + $0x10] sm:$0xff]
    %v269 = vld [vmem:[%s4 + $0x18] sm:$0xff]
    %v270 = vld [vmem:[%s4 + $0x20] sm:$0xff]
    %v271 = vld [vmem:[%s4 + $0x28] sm:$0xff]
    %v272 = vld [vmem:[%s4 + $0x30] sm:$0xff]
    %v273 = vld [vmem:[%s4 + $0x38] sm:$0xff]
    %275 = vset.pattern.permute.xlu0 0
    %276 = vperm.xlu0 %275, %v266
    %v277 = vpop.permute.xlu0 %276
    %280 = vset.pattern.permute.xlu0 0
    %281 = vperm.xlu0 %280, %v267
    %v282 = vpop.permute.xlu0 %281
    %285 = vset.pattern.permute.xlu0 0
    %286 = vperm.xlu0 %285, %v268
    %v287 = vpop.permute.xlu0 %286
    %290 = vset.pattern.permute.xlu0 0
    %291 = vperm.xlu0 %290, %v269
    %v292 = vpop.permute.xlu0 %291
    %295 = vset.pattern.permute.xlu0 0
    %296 = vperm.xlu0 %295, %v270
    %v297 = vpop.permute.xlu0 %296
    %300 = vset.pattern.permute.xlu0 0
    %301 = vperm.xlu0 %300, %v271
    %v302 = vpop.permute.xlu0 %301
    %305 = vset.pattern.permute.xlu0 0
    %306 = vperm.xlu0 %305, %v272
    %v307 = vpop.permute.xlu0 %306
    %310 = vset.pattern.permute.xlu0 0
    %311 = vperm.xlu0 %310, %v273
    %v312 = vpop.permute.xlu0 %311
    %vm314 = vcmask 523264
    %v316 = vsel %vm314, %v258, 0
    %v319 = vsel %vm314, %v259, 0
    %v322 = vsel %vm314, %v260, 0
    %v325 = vsel %vm314, %v261, 0
    %v328 = vsel %vm314, %v262, 0
    %v331 = vsel %vm314, %v263, 0
    %v334 = vsel %vm314, %v264, 0
    %v337 = vsel %vm314, %v265, 0
    %339 = vmatprep.subr.mxu0 0.0
    %340 = vmatpush1.msra.mxu0 %v250
    %341 = vmatprep.subr.mxu0 0.0
    %342 = vmatpush1.msra.mxu0 %v251
    %343 = vmatprep.subr.mxu0 0.0
    %344 = vmatpush1.msra.mxu0 %v252
    %345 = vmatprep.subr.mxu0 0.0
    %346 = vmatpush1.msra.mxu0 %v253
    %347 = vmatprep.subr.mxu0 0.0
    %348 = vmatpush1.msra.mxu0 %v254
    %349 = vmatprep.subr.mxu0 0.0
    %350 = vmatpush1.msra.mxu0 %v255
    %351 = vmatprep.subr.mxu0 0.0
    %352 = vmatpush1.msra.mxu0 %v256
    %353 = vmatprep.subr.mxu0 0.0
    %354 = vmatpush1.msra.mxu0 %v257
    %355 = vmatprep.subr.mxu0 0.0
    %356 = vmatpush1.msra.mxu0 0.0
    %357 = vmatprep.subr.mxu0 0.0
    %358 = vmatpush1.msra.mxu0 0.0
    %359 = vmatprep.subr.mxu0 0.0
    %360 = vmatpush1.msra.mxu0 0.0
    %361 = vmatprep.subr.mxu0 0.0
    %362 = vmatpush1.msra.mxu0 0.0
    %363 = vmatprep.subr.mxu0 0.0
    %364 = vmatpush1.msra.mxu0 0.0
    %365 = vmatprep.subr.mxu0 0.0
    %366 = vmatpush1.msra.mxu0 0.0
    %367 = vmatprep.subr.mxu0 0.0
    %368 = vmatpush1.msra.mxu0 0.0
    %369 = vmatprep.subr.mxu0 0.0
    %370 = vmatpush1.msra.mxu0 0.0
    %371 = vmatprep.subr.mxu0 0.0
    %372 = vmatpush1.msra.mxu0 0.0
    %373 = vmatprep.subr.mxu0 0.0
    %374 = vmatpush1.msra.mxu0 0.0
    %375 = vmatprep.subr.mxu0 0.0
    %376 = vmatpush1.msra.mxu0 0.0
    %377 = vmatprep.subr.mxu0 0.0
    %378 = vmatpush1.msra.mxu0 0.0
    %379 = vmatprep.subr.mxu0 0.0
    %380 = vmatpush1.msra.mxu0 0.0
    %381 = vmatprep.subr.mxu0 0.0
    %382 = vmatpush1.msra.mxu0 0.0
    %383 = vmatprep.subr.mxu0 0.0
    %384 = vmatpush1.msra.mxu0 0.0
    %385 = vmatprep.subr.mxu0 0.0
    %386 = vmatpush1.msra.mxu0 0.0
    %387 = vmatprep.subr.mxu0 0.0
    %388 = vmatpush1.msra.mxu0 0.0
    %389 = vmatprep.subr.mxu0 0.0
    %390 = vmatpush1.msra.mxu0 0.0
    %391 = vmatprep.subr.mxu0 0.0
    %392 = vmatpush1.msra.mxu0 0.0
    %393 = vmatprep.subr.mxu0 0.0
    %394 = vmatpush1.msra.mxu0 0.0
    %395 = vmatprep.subr.mxu0 0.0
    %396 = vmatpush1.msra.mxu0 0.0
    %397 = vmatprep.subr.mxu0 0.0
    %398 = vmatpush1.msra.mxu0 0.0
    %399 = vmatprep.subr.mxu0 0.0
    %400 = vmatpush1.msra.mxu0 0.0
    %401 = vmatprep.subr.mxu0 0.0
    %402 = vmatpush1.msra.mxu0 0.0
    %403 = vmatprep.mubr.f32.mxu0 0.0
    %404 = vmatmul.mubr.f32.gmra.mrb[0].mxu0 %v316
    %v405 = vpop.f32.mrb[0].mxu0
    %v406 = vadd.f32 %v277, %v405
    %v407 = vpop.f32.mrb[0].mxu0
    %408 = vmatprep.mubr.f32.mxu0 0.0
    %409 = vmatmul.mubr.f32.gmra.mrb[0].mxu0 %v319
    %v410 = vpop.f32.mrb[0].mxu0
    %v411 = vadd.f32 %v282, %v410
    %v412 = vpop.f32.mrb[0].mxu0
    %413 = vmatprep.mubr.f32.mxu0 0.0
    %414 = vmatmul.mubr.f32.gmra.mrb[0].mxu0 %v322
    %v415 = vpop.f32.mrb[0].mxu0
    %v416 = vadd.f32 %v287, %v415
    %v417 = vpop.f32.mrb[0].mxu0
    %418 = vmatprep.mubr.f32.mxu0 0.0
    %419 = vmatmul.mubr.f32.gmra.mrb[0].mxu0 %v325
    %v420 = vpop.f32.mrb[0].mxu0
    %v421 = vadd.f32 %v292, %v420
    %v422 = vpop.f32.mrb[0].mxu0
    %423 = vmatprep.mubr.f32.mxu0 0.0
    %424 = vmatmul.mubr.f32.gmra.mrb[0].mxu0 %v328
    %v425 = vpop.f32.mrb[0].mxu0
    %v426 = vadd.f32 %v297, %v425
    %v427 = vpop.f32.mrb[0].mxu0
    %428 = vmatprep.mubr.f32.mxu0 0.0
    %429 = vmatmul.mubr.f32.gmra.mrb[0].mxu0 %v331
    %v430 = vpop.f32.mrb[0].mxu0
    %v431 = vadd.f32 %v302, %v430
    %v432 = vpop.f32.mrb[0].mxu0
    %433 = vmatprep.mubr.f32.mxu0 0.0
    %434 = vmatmul.mubr.f32.gmra.mrb[0].mxu0 %v334
    %v435 = vpop.f32.mrb[0].mxu0
    %v436 = vadd.f32 %v307, %v435
    %v437 = vpop.f32.mrb[0].mxu0
    %438 = vmatprep.mubr.f32.mxu0 0.0
    %439 = vmatmul.mubr.f32.gmra.mrb[0].mxu0 %v337
    %v440 = vpop.f32.mrb[0].mxu0
    %v441 = vadd.f32 %v312, %v440
    %v442 = vpop.f32.mrb[0].mxu0
    %443 = vdwg.mxu0
    %v444 = vmax.f32 %v406, 0.0
    %v445 = vmax.f32 %v411, 0.0
    %v446 = vmax.f32 %v416, 0.0
    %v447 = vmax.f32 %v421, 0.0
    %v448 = vmax.f32 %v426, 0.0
    %v449 = vmax.f32 %v431, 0.0
    %v450 = vmax.f32 %v436, 0.0
    %v451 = vmax.f32 %v441, 0.0
    %v452 = vld [vmem:[%s5] sm:$0xff]
    %v453 = vld [vmem:[%s5 + $0x8] sm:$0xff]
    %v454 = vld [vmem:[%s5 + $0x10] sm:$0xff]
    %v455 = vld [vmem:[%s5 + $0x18] sm:$0xff]
    %v456 = vld [vmem:[%s5 + $0x20] sm:$0xff]
    %v457 = vld [vmem:[%s5 + $0x28] sm:$0xff]
    %v458 = vld [vmem:[%s5 + $0x30] sm:$0xff]
    %v459 = vld [vmem:[%s5 + $0x38] sm:$0xff]
    %461 = vset.pattern.permute.xlu0 0
    %462 = vperm.xlu0 %461, %v452
    %v463 = vpop.permute.xlu0 %462
    %466 = vset.pattern.permute.xlu0 0
    %467 = vperm.xlu0 %466, %v453
    %v468 = vpop.permute.xlu0 %467
    %471 = vset.pattern.permute.xlu0 0
    %472 = vperm.xlu0 %471, %v454
    %v473 = vpop.permute.xlu0 %472
    %476 = vset.pattern.permute.xlu0 0
    %477 = vperm.xlu0 %476, %v455
    %v478 = vpop.permute.xlu0 %477
    %481 = vset.pattern.permute.xlu0 0
    %482 = vperm.xlu0 %481, %v456
    %v483 = vpop.permute.xlu0 %482
    %486 = vset.pattern.permute.xlu0 0
    %487 = vperm.xlu0 %486, %v457
    %v488 = vpop.permute.xlu0 %487
    %491 = vset.pattern.permute.xlu0 0
    %492 = vperm.xlu0 %491, %v458
    %v493 = vpop.permute.xlu0 %492
    %496 = vset.pattern.permute.xlu0 0
    %497 = vperm.xlu0 %496, %v459
    %v498 = vpop.permute.xlu0 %497
    %v500 = vmul.f32 %v463, %v444
    %v501 = vmul.f32 %v468, %v445
    %v502 = vmul.f32 %v473, %v446
    %v503 = vmul.f32 %v478, %v447
    %v504 = vmul.f32 %v483, %v448
    %v505 = vmul.f32 %v488, %v449
    %v506 = vmul.f32 %v493, %v450
    %v507 = vmul.f32 %v498, %v451
    %v508 = vadd.f32 %v500, %v501
    %v509 = vadd.f32 %v508, %v502
    %v510 = vadd.f32 %v509, %v503
    %v511 = vadd.f32 %v510, %v504
    %v512 = vadd.f32 %v511, %v505
    %v513 = vadd.f32 %v512, %v506
    %v514 = vadd.f32 %v513, %v507
    %v515 = vrot.slane %v514, 4
    %v516 = vadd.f32 %v514, %v515
    %v517 = vrot.slane %v516, 2
    %v518 = vadd.f32 %v516, %v517
    %v519 = vrot.slane %v518, 1
    %v520 = vadd.f32 %v518, %v519
    %v521 = vld [vmem:[#allocation2] sm:$0x1]
    %523 = vset.pattern.permute.xlu0 0
    %524 = vperm.xlu0 %523, %v521
    %v525 = vpop.permute.xlu0 %524
    %v527 = vlaneseq
    %v528 = vshrl.u32 %v527, 7
    %v529 = vsub.s32 0, %v528
    %v530 = vrot.slane %v525, %v529
    %v531 = vadd.f32 %v520, %v530
    %532 = vst [vmem:[#allocation3] sm:$0x1] %v531
    // Predicated region
    $region30: #{tpu_custom_call.1} parent=1 // pred_check
      _
    $region31: #{tpu_custom_call.1} parent=1 // pred_check_branch
      %534 = sbr.rel (0) target = $region33
    $region32: #{tpu_custom_call.1} parent=1 // pred_region
      %s536 = ssub.s32 16, 16
      %537 = vsyncadd [#allocation4], %s536
      %s539 = sshll.u32 [#allocation3], 4
      %s540 = int_to_ptr.vmem [resolvable:$true] %s539
      %542 = dma.vmem_to_hbm [thread:$0]  %s540, 16, %s7, [#allocation4]
    $region33: #{tpu_custom_call.1} parent=1 // pred_fallthru
      _
    // Predicated region
    $region34: #{tpu_custom_call.1} parent=1 // pred_check
      _
    $region35: #{tpu_custom_call.1} parent=1 // pred_check_branch
      %544 = sbr.rel (0) target = $region37
    $region36: #{tpu_custom_call.1} parent=1 // pred_region
      %545 = dma.done [#allocation4], 16
    $region37: #{tpu_custom_call.1} parent=1 // pred_fallthru
      _
    %546 = vsyncpa [#allocation4], 1

</llo_original>
